<compile_context>
chip_gen: v6e
topology: v6e:2x2x1
jax: 0.10.0
libtpu: 0.0.40
codegen_flags: <defaults>
</compile_context>

<pallas_src>
import functools
import math

import jax
import jax.numpy as jnp
from jax.experimental import pallas as pl
from jax.experimental.pallas import tpu as pltpu

_LANE = 128  # TPU lane width


# ----------------------------- kernel ---------------------------------------


def _policy_kernel(x_ref, w1_ref, b1_ref, w2_ref, b2_ref, w3_ref, b3_ref, o_ref,
                   *, compute_dtype, action_dim, sub_rows):
    """One batch tile; weights are VMEM-resident and already in compute_dtype."""
    tb = x_ref.shape[0]

    # Hoist the (tiny) resident weight/bias loads out of the sub-chunk loop.
    w1 = w1_ref[...]
    b1 = b1_ref[...]
    w2 = w2_ref[...]
    b2 = b2_ref[...]
    w3 = w3_ref[...]
    b3 = b3_ref[...]  # f32, padded lanes hold -inf

    def chunk(row0, rows):
        x = x_ref[pl.ds(row0, rows), :].astype(compute_dtype)

        h1 = jnp.dot(x, w1, preferred_element_type=jnp.float32) + b1
        h1 = jnp.tanh(h1.astype(compute_dtype))

        h2 = jnp.dot(h1, w2, preferred_element_type=jnp.float32) + b2
        h2 = jnp.tanh(h2.astype(compute_dtype))

        # Lane-dense (128-wide) logits; padded lanes have bias = -inf so they
        # contribute exp() == 0 to the softmax exactly.  Softmax math in f32.
        logits = jnp.dot(h2, w3, preferred_element_type=jnp.float32) + b3
        m = jnp.max(logits, axis=-1, keepdims=True)
        e = jnp.exp(logits - m)
        denom = jnp.sum(e, axis=-1, keepdims=True)
        probs = e * pl.reciprocal(denom, approx=True)

        # Store only the real action columns (narrow, masked vst).
        o_ref[pl.ds(row0, rows), :] = probs[:, :action_dim].astype(o_ref.dtype)

    n_full = tb // sub_rows
    rem = tb % sub_rows

    if n_full > 0:
        @pl.loop(0, n_full)
        def _(c):
            chunk(pl.multiple_of(c * sub_rows, sub_rows), sub_rows)
    if rem > 0:
        chunk(n_full * sub_rows, rem)


# ----------------------------- wrapper ---------------------------------------


def _device_kind():
    try:
        return jax.devices()[0].device_kind.lower()
    except Exception:  # pragma: no cover - defensive
        return ""


def _chip_defaults():
    kind = _device_kind()
    is_v6 = "v6" in kind
    is_v7 = ("v7" in kind) or ("7x" in kind)
    compute_dtype = jnp.bfloat16 if (is_v6 or is_v7) else jnp.float32
    num_cores = 2 if is_v7 else 1
    block_batch = 4096 if is_v6 else 2048
    return compute_dtype, num_cores, block_batch


def _round_up(x, m):
    return ((int(x) + m - 1) // m) * m


def policy_forward(state, params, *, block_batch=None, compute_dtype=None,
                   out_dtype=None, sub_rows=256):
    """state: (B, state_dim) float32. Returns softmax action probs (B, action_dim)."""
    w1, b1, w2, b2, w3, b3 = params
    B, state_dim = state.shape
    action_dim = w3.shape[1]

    auto_compute, num_cores, auto_bb = _chip_defaults()
    if compute_dtype is None:
        compute_dtype = auto_compute
    if block_batch is None:
        block_batch = auto_bb
    if out_dtype is None:
        out_dtype = jnp.float32  # match PyTorch; pass bf16 to halve write bytes

    # ---- Lane-dense padding of the last layer (zero weights, -inf bias). ----
    a_pad = max(_LANE, pl.cdiv(action_dim, _LANE) * _LANE)
    w3p = jnp.zeros((w3.shape[0], a_pad), jnp.float32).at[:, :action_dim].set(w3)
    b3p = jnp.full((1, a_pad), -jnp.inf, jnp.float32).at[:, :action_dim].set(b3[0])

    # ---- Pre-cast weights to the compute dtype (biases stay f32 for the f32
    # accumulator path and the -inf padding). ----
    w1c = w1.astype(compute_dtype)
    w2c = w2.astype(compute_dtype)
    w3c = w3p.astype(compute_dtype)

    # ---- Batch tiling: round8 tile derived from the grid count so padding
    # waste stays small; force >= num_cores steps (v7x megacore) when possible.
    tb_max = max(8, _round_up(block_batch, 8))
    grid_b = max(1, pl.cdiv(B, tb_max))
    if num_cores > 1 and B >= 2 * 8:
        grid_b = max(grid_b, num_cores)
    tb = max(8, _round_up(pl.cdiv(B, grid_b), 8))
    grid_b = pl.cdiv(B, tb)
    b_pad = grid_b * tb
    if b_pad != B:
        state = jnp.pad(state, ((0, b_pad - B), (0, 0)))  # zero rows, sliced off below

    # ---- Cost estimate + VMEM budget sized from actual block bytes. ----
    c_item = jnp.dtype(compute_dtype).itemsize
    o_item = jnp.dtype(out_dtype).itemsize
    w_bytes = (state_dim * 64 + 64 * 32 + 32 * a_pad) * c_item + (64 + 32 + a_pad) * 4
    x_block = tb * state_dim * 4
    o_block = tb * action_dim * o_item
    sub_eff = min(sub_rows, tb)
    scratch_est = sub_eff * (state_dim + 64 + 32 + 2 * a_pad) * 4
    vmem_limit = 2 * (x_block + o_block) + 2 * w_bytes + 4 * scratch_est + (8 << 20)
    vmem_limit = int(min(max(vmem_limit, 16 << 20), 48 << 20))

    cost = pl.CostEstimate(
        flops=2 * b_pad * (state_dim * 64 + 64 * 32 + 32 * a_pad),
        transcendentals=b_pad * (64 + 32 + a_pad + 1),
        bytes_accessed=b_pad * state_dim * 4 + b_pad * action_dim * o_item + w_bytes,
    )

    kernel = functools.partial(_policy_kernel, compute_dtype=compute_dtype,
                               action_dim=action_dim, sub_rows=sub_rows)

    out = pl.pallas_call(
        kernel,
        out_shape=jax.ShapeDtypeStruct((b_pad, action_dim), out_dtype),
        grid=(grid_b,),
        in_specs=[
            pl.BlockSpec((tb, state_dim), lambda i: (i, 0)),   # activations: streamed
            pl.BlockSpec((state_dim, 64), lambda i: (0, 0)),   # weights: resident
            pl.BlockSpec((1, 64), lambda i: (0, 0)),
            pl.BlockSpec((64, 32), lambda i: (0, 0)),
            pl.BlockSpec((1, 32), lambda i: (0, 0)),
            pl.BlockSpec((32, a_pad), lambda i: (0, 0)),
            pl.BlockSpec((1, a_pad), lambda i: (0, 0)),
        ],
        out_specs=pl.BlockSpec((tb, action_dim), lambda i: (i, 0)),
        compiler_params=pltpu.CompilerParams(
            dimension_semantics=("parallel",),
            vmem_limit_bytes=vmem_limit,
        ),
        cost_estimate=cost,
    )(state, w1c, b1, w2c, b2, w3c, b3p)

    # Only slice when the batch was actually padded (avoids a second HBM pass
    # in the common aligned case).
    return out if b_pad == B else out[:B]


# ----------------------------- reference / init ------------------------------


def init_policy_params(key, state_dim, action_dim):
    """PyTorch-style uniform(-1/sqrt(fan_in), 1/sqrt(fan_in)) init.

    Weights stored as (in_features, out_features); biases as (1, out_features).
    """
    dims = [(state_dim, 64), (64, 32), (32, action_dim)]
    params = []
    for i, (fan_in, fan_out) in enumerate(dims):
        kw, kb = jax.random.split(jax.random.fold_in(key, i))
        bound = 1.0 / math.sqrt(fan_in)
        w = jax.random.uniform(kw, (fan_in, fan_out), jnp.float32, -bound, bound)
        b = jax.random.uniform(kb, (1, fan_out), jnp.float32, -bound, bound)
        params.extend([w, b])
    return tuple(params)


def _reference_forward(state, params):
    w1, b1, w2, b2, w3, b3 = params
    h1 = jnp.tanh(state @ w1 + b1)
    h2 = jnp.tanh(h1 @ w2 + b2)
    logits = h2 @ w3 + b3
    return jax.nn.softmax(logits, axis=-1)


if __name__ == "__main__":
    key = jax.random.PRNGKey(0)
    state_dim, action_dim, batch = 16, 8, 2

    k_params, k_state = jax.random.split(key)
    params = init_policy_params(k_params, state_dim, action_dim)
    state = jax.random.normal(k_state, (batch, state_dim), jnp.float32)

    ref = _reference_forward(state, params)

    # f32 activation path: exact parity modulo the approximate EUP reciprocal.
    out = policy_forward(state, params, compute_dtype=jnp.float32)
    jax.block_until_ready(out)
    assert out.shape == (batch, action_dim)
    assert out.dtype == jnp.float32
    assert jnp.allclose(jnp.sum(out, axis=-1), 1.0, atol=5e-3)
    assert jnp.allclose(out, ref, atol=5e-3, rtol=5e-3)

    # Auto dtype (bf16 activations on v6e/v7x, f32 elsewhere): looser tolerance.
    out_auto = policy_forward(state, params)
    jax.block_until_ready(out_auto)
    assert jnp.allclose(out_auto.astype(jnp.float32), ref, atol=3e-2, rtol=3e-2)

    # bf16 output variant (halves the dominant HBM write).
    out_bf16 = policy_forward(state, params, compute_dtype=jnp.float32,
                              out_dtype=jnp.bfloat16)
    jax.block_until_ready(out_bf16)
    assert out_bf16.dtype == jnp.bfloat16
    assert jnp.allclose(out_bf16.astype(jnp.float32), ref, atol=1e-2, rtol=1e-2)

    # Multi-tile grid + batch padding + narrow (action_dim-wide) output.
    big_state = jax.random.normal(jax.random.fold_in(key, 7), (130, state_dim), jnp.float32)
    big_out = policy_forward(big_state, params, block_batch=64, compute_dtype=jnp.float32)
    jax.block_until_ready(big_out)
    big_ref = _reference_forward(big_state, params)
    assert big_out.shape == (130, action_dim)
    assert jnp.allclose(big_out, big_ref, atol=5e-3, rtol=5e-3)

    # Exercise the in-kernel sub-chunk loop (tb > sub_rows).
    huge_state = jax.random.normal(jax.random.fold_in(key, 11), (1024, state_dim), jnp.float32)
    huge_out = policy_forward(huge_state, params, block_batch=1024,
                              compute_dtype=jnp.float32, sub_rows=256)
    jax.block_until_ready(huge_out)
    huge_ref = _reference_forward(huge_state, params)
    assert huge_out.shape == (1024, action_dim)
    assert jnp.allclose(huge_out, huge_ref, atol=5e-3, rtol=5e-3)

    print("KERNEL_OK")
</pallas_src>

<mosaic_0001>
module attributes {stable_mosaic.version = 11 : i64} {
  func.func @_policy_kernel(%arg0: i32, %arg1: memref<8x16xf32, #tpu.memory_space<vmem>>, %arg2: memref<16x64xf32, #tpu.memory_space<vmem>>, %arg3: memref<1x64xf32, #tpu.memory_space<vmem>>, %arg4: memref<64x32xf32, #tpu.memory_space<vmem>>, %arg5: memref<1x32xf32, #tpu.memory_space<vmem>>, %arg6: memref<32x128xf32, #tpu.memory_space<vmem>>, %arg7: memref<1x128xf32, #tpu.memory_space<vmem>>, %arg8: memref<8x8xf32, #tpu.memory_space<vmem>>) attributes {dimension_semantics = [#tpu.dimension_semantics<parallel>], iteration_bounds = array<i64: 1>, scalar_prefetch = 0 : i64, scratch_operands = 0 : i64, tpu.core_type = #tpu.core_type<tc>, window_params = [{transform_indices = @transform_0, window_bounds = array<i64: 8, 16>}, {pipeline_mode = #tpu.pipeline_mode<synchronous>, transform_indices = @transform_1, window_bounds = array<i64: 16, 64>}, {pipeline_mode = #tpu.pipeline_mode<synchronous>, transform_indices = @transform_2, window_bounds = array<i64: 1, 64>}, {pipeline_mode = #tpu.pipeline_mode<synchronous>, transform_indices = @transform_3, window_bounds = array<i64: 64, 32>}, {pipeline_mode = #tpu.pipeline_mode<synchronous>, transform_indices = @transform_4, window_bounds = array<i64: 1, 32>}, {pipeline_mode = #tpu.pipeline_mode<synchronous>, transform_indices = @transform_5, window_bounds = array<i64: 32, 128>}, {pipeline_mode = #tpu.pipeline_mode<synchronous>, transform_indices = @transform_6, window_bounds = array<i64: 1, 128>}, {transform_indices = @transform_7, window_bounds = array<i64: 8, 8>}]} {
    %c0 = arith.constant 0 : index
    %c0_0 = arith.constant 0 : index
    %0 = vector.load %arg2[%c0, %c0_0] : memref<16x64xf32, #tpu.memory_space<vmem>>, vector<16x64xf32>
    %c0_1 = arith.constant 0 : index
    %c0_2 = arith.constant 0 : index
    %1 = vector.load %arg3[%c0_1, %c0_2] : memref<1x64xf32, #tpu.memory_space<vmem>>, vector<1x64xf32>
    %c0_3 = arith.constant 0 : index
    %c0_4 = arith.constant 0 : index
    %2 = vector.load %arg4[%c0_3, %c0_4] : memref<64x32xf32, #tpu.memory_space<vmem>>, vector<64x32xf32>
    %c0_5 = arith.constant 0 : index
    %c0_6 = arith.constant 0 : index
    %3 = vector.load %arg5[%c0_5, %c0_6] : memref<1x32xf32, #tpu.memory_space<vmem>>, vector<1x32xf32>
    %c0_7 = arith.constant 0 : index
    %c0_8 = arith.constant 0 : index
    %4 = vector.load %arg6[%c0_7, %c0_8] : memref<32x128xf32, #tpu.memory_space<vmem>>, vector<32x128xf32>
    %c0_9 = arith.constant 0 : index
    %c0_10 = arith.constant 0 : index
    %5 = vector.load %arg7[%c0_9, %c0_10] : memref<1x128xf32, #tpu.memory_space<vmem>>, vector<1x128xf32>
    %c0_11 = arith.constant 0 : index
    %c0_12 = arith.constant 0 : index
    %6 = vector.load %arg1[%c0_11, %c0_12] : memref<8x16xf32, #tpu.memory_space<vmem>>, vector<8x16xf32>
    %cst = arith.constant dense<0.000000e+00> : vector<8x64xf32>
    %7 = tpu.matmul %6, %0, %cst {dimension_numbers = #tpu.dot_dimension_numbers<[1], [0], [0], [1], [0, 0, 1, 1], [], []>} : vector<8x16xf32>, vector<16x64xf32>, vector<8x64xf32> -> vector<8x64xf32>
    %8 = vector.broadcast %1 : vector<1x64xf32> to vector<8x64xf32>
    %9 = arith.addf %7, %8 : vector<8x64xf32>
    %10 = math.tanh %9 : vector<8x64xf32>
    %cst_13 = arith.constant dense<0.000000e+00> : vector<8x32xf32>
    %11 = tpu.matmul %10, %2, %cst_13 {dimension_numbers = #tpu.dot_dimension_numbers<[1], [0], [0], [1], [0, 0, 1, 1], [], []>} : vector<8x64xf32>, vector<64x32xf32>, vector<8x32xf32> -> vector<8x32xf32>
    %12 = vector.broadcast %3 : vector<1x32xf32> to vector<8x32xf32>
    %13 = arith.addf %11, %12 : vector<8x32xf32>
    %14 = math.tanh %13 : vector<8x32xf32>
    %cst_14 = arith.constant dense<0.000000e+00> : vector<8x128xf32>
    %15 = tpu.matmul %14, %4, %cst_14 {dimension_numbers = #tpu.dot_dimension_numbers<[1], [0], [0], [1], [0, 0, 1, 1], [], []>} : vector<8x32xf32>, vector<32x128xf32>, vector<8x128xf32> -> vector<8x128xf32>
    %16 = vector.broadcast %5 : vector<1x128xf32> to vector<8x128xf32>
    %17 = arith.addf %15, %16 : vector<8x128xf32>
    %cst_15 = arith.constant dense<0xFF800000> : vector<8xf32>
    %18 = vector.multi_reduction <maximumf>, %17, %cst_15 [1] : vector<8x128xf32> to vector<8xf32>
    %19 = vector.shape_cast %18 : vector<8xf32> to vector<8x1xf32>
    %20 = vector.broadcast %19 : vector<8x1xf32> to vector<8x128xf32>
    %21 = arith.subf %17, %20 : vector<8x128xf32>
    %22 = math.exp %21 : vector<8x128xf32>
    %cst_16 = arith.constant dense<0.000000e+00> : vector<8xf32>
    %23 = vector.multi_reduction <add>, %22, %cst_16 [1] : vector<8x128xf32> to vector<8xf32>
    %24 = vector.shape_cast %23 : vector<8xf32> to vector<8x1xf32>
    %25 = tpu.reciprocal %24 {approx = true} : vector<8x1xf32> -> vector<8x1xf32>
    %26 = vector.broadcast %25 : vector<8x1xf32> to vector<8x128xf32>
    %27 = arith.mulf %22, %26 : vector<8x128xf32>
    %28 = vector.extract_strided_slice %27 {offsets = [0, 0], sizes = [8, 8], strides = [1, 1]} : vector<8x128xf32> to vector<8x8xf32>
    %c0_17 = arith.constant 0 : index
    %c0_18 = arith.constant 0 : index
    %29 = vector.load %arg8[%c0_17, %c0_18] : memref<8x8xf32, #tpu.memory_space<vmem>>, vector<8x8xf32>
    tpu.vector_store %arg8[%c0_17, %c0_18], %28 {strides = array<i32>} : memref<8x8xf32, #tpu.memory_space<vmem>>, vector<8x8xf32>,
    return
  }
  func.func @transform_0(%arg0: i32) -> (i32, i32) {
    %c0_i32 = arith.constant 0 : i32
    %c0_i32_0 = arith.constant 0 : i32
    return %arg0, %c0_i32 : i32, i32
  }
  func.func @transform_1(%arg0: i32) -> (i32, i32) {
    %c0_i32 = arith.constant 0 : i32
    %c0_i32_0 = arith.constant 0 : i32
    %c0_i32_1 = arith.constant 0 : i32
    return %c0_i32, %c0_i32_0 : i32, i32
  }
  func.func @transform_2(%arg0: i32) -> (i32, i32) {
    %c0_i32 = arith.constant 0 : i32
    %c0_i32_0 = arith.constant 0 : i32
    %c0_i32_1 = arith.constant 0 : i32
    return %c0_i32, %c0_i32_0 : i32, i32
  }
  func.func @transform_3(%arg0: i32) -> (i32, i32) {
    %c0_i32 = arith.constant 0 : i32
    %c0_i32_0 = arith.constant 0 : i32
    %c0_i32_1 = arith.constant 0 : i32
    return %c0_i32, %c0_i32_0 : i32, i32
  }
  func.func @transform_4(%arg0: i32) -> (i32, i32) {
    %c0_i32 = arith.constant 0 : i32
    %c0_i32_0 = arith.constant 0 : i32
    %c0_i32_1 = arith.constant 0 : i32
    return %c0_i32, %c0_i32_0 : i32, i32
  }
  func.func @transform_5(%arg0: i32) -> (i32, i32) {
    %c0_i32 = arith.constant 0 : i32
    %c0_i32_0 = arith.constant 0 : i32
    %c0_i32_1 = arith.constant 0 : i32
    return %c0_i32, %c0_i32_0 : i32, i32
  }
  func.func @transform_6(%arg0: i32) -> (i32, i32) {
    %c0_i32 = arith.constant 0 : i32
    %c0_i32_0 = arith.constant 0 : i32
    %c0_i32_1 = arith.constant 0 : i32
    return %c0_i32, %c0_i32_0 : i32, i32
  }
  func.func @transform_7(%arg0: i32) -> (i32, i32) {
    %c0_i32 = arith.constant 0 : i32
    %c0_i32_0 = arith.constant 0 : i32
    return %arg0, %c0_i32 : i32, i32
  }
}

</mosaic_0001>

<llo_original>
// kernel: tpu_custom_call.1
$region0: #{tpu_custom_call.1}
  #allocation0 [shape = 'u32[]', space=smem, size = 0x4, offset = 0x4, fixed_abs, tag = 'smem constant byte address 0x4 - core index']
  #allocation1 [shape = 'u32[144,128]{1,0:T(1,128)}', space=vmem, size = 0x12000, scoped, tag = 'internal scratch']
  %s0 = inlined_call_operand.vmem [shape: f32[8,16], index: 0, kind: input, shape index: {}]
  %s1 = inlined_call_operand.vmem [shape: f32[16,64], index: 1, kind: input, shape index: {}]
  %s2 = inlined_call_operand.vmem [shape: f32[1,64], index: 2, kind: input, shape index: {}]
  %s3 = inlined_call_operand.vmem [shape: f32[64,32], index: 3, kind: input, shape index: {}]
  %s4 = inlined_call_operand.vmem [shape: f32[1,32], index: 4, kind: input, shape index: {}]
  %s5 = inlined_call_operand.vmem [shape: f32[32,128], index: 5, kind: input, shape index: {}]
  %s6 = inlined_call_operand.vmem [shape: f32[1,128], index: 6, kind: input, shape index: {}]
  %s7 = inlined_call_operand.hbm [shape: f32[8,8], index: 7, kind: output, shape index: {}]
  %s8 = sld [smem:[#allocation0]]
  $region38: #{tpu_custom_call.1} parent=0
    _
  %s10 = ssub.s32 1, %s8
  %s11 = scalar_select 0, %s10, %s8
  $region1: #{tpu_custom_call.1} parent=0
    #allocation2 [shape = 'u8[4096]{0}', space=vmem, size = 0x1000, scoped, tag = 'output window, operand 0, single buffered']
    #allocation3 [shape = 's32[1]{0}', space=sflag, size = 0x4, scoped, tag = 'scoped memory for tpu_custom_call.1']
    %12 = vsyncpa [#allocation3], 0
    // Predicated region
    $region2: #{tpu_custom_call.1} parent=1 // pred_check
      _
    $region3: #{tpu_custom_call.1} parent=1 // pred_check_branch
      %14 = sbr.rel (0) target = $region5
    $region4: #{tpu_custom_call.1} parent=1 // pred_region
      _
    $region5: #{tpu_custom_call.1} parent=1 // pred_fallthru
      _
    // Predicated region
    $region6: #{tpu_custom_call.1} parent=1 // pred_check
      _
    $region7: #{tpu_custom_call.1} parent=1 // pred_check_branch
      %16 = sbr.rel (0) target = $region9
    $region8: #{tpu_custom_call.1} parent=1 // pred_region
      _
    $region9: #{tpu_custom_call.1} parent=1 // pred_fallthru
      _
    // Predicated region
    $region10: #{tpu_custom_call.1} parent=1 // pred_check
      _
    $region11: #{tpu_custom_call.1} parent=1 // pred_check_branch
      %18 = sbr.rel (0) target = $region13
    $region12: #{tpu_custom_call.1} parent=1 // pred_region
      _
    $region13: #{tpu_custom_call.1} parent=1 // pred_fallthru
      _
    // Predicated region
    $region14: #{tpu_custom_call.1} parent=1 // pred_check
      _
    $region15: #{tpu_custom_call.1} parent=1 // pred_check_branch
      %20 = sbr.rel (0) target = $region17
    $region16: #{tpu_custom_call.1} parent=1 // pred_region
      _
    $region17: #{tpu_custom_call.1} parent=1 // pred_fallthru
      _
    // Predicated region
    $region18: #{tpu_custom_call.1} parent=1 // pred_check
      _
    $region19: #{tpu_custom_call.1} parent=1 // pred_check_branch
      %22 = sbr.rel (0) target = $region21
    $region20: #{tpu_custom_call.1} parent=1 // pred_region
      _
    $region21: #{tpu_custom_call.1} parent=1 // pred_fallthru
      _
    // Predicated region
    $region22: #{tpu_custom_call.1} parent=1 // pred_check
      _
    $region23: #{tpu_custom_call.1} parent=1 // pred_check_branch
      %24 = sbr.rel (0) target = $region25
    $region24: #{tpu_custom_call.1} parent=1 // pred_region
      _
    $region25: #{tpu_custom_call.1} parent=1 // pred_fallthru
      _
    // Predicated region
    $region26: #{tpu_custom_call.1} parent=1 // pred_check
      _
    $region27: #{tpu_custom_call.1} parent=1 // pred_check_branch
      %26 = sbr.rel (0) target = $region29
    $region28: #{tpu_custom_call.1} parent=1 // pred_region
      _
    $region29: #{tpu_custom_call.1} parent=1 // pred_fallthru
      _
    %v27 = vld [vmem:[%s1] sm:$0xff]
    %v28 = vld [vmem:[%s1 + $0x8] sm:$0xff]
    %v29 = vld [vmem:[%s2] sm:$0x1]
    %v30 = vld [vmem:[%s3] sm:$0xff]
    %v31 = vld [vmem:[%s3 + $0x8] sm:$0xff]
    %v32 = vld [vmem:[%s3 + $0x10] sm:$0xff]
    %v33 = vld [vmem:[%s3 + $0x18] sm:$0xff]
    %v34 = vld [vmem:[%s3 + $0x20] sm:$0xff]
    %v35 = vld [vmem:[%s3 + $0x28] sm:$0xff]
    %v36 = vld [vmem:[%s3 + $0x30] sm:$0xff]
    %v37 = vld [vmem:[%s3 + $0x38] sm:$0xff]
    %v38 = vld [vmem:[%s4] sm:$0x1]
    %v39 = vld [vmem:[%s5] sm:$0xff]
    %v40 = vld [vmem:[%s5 + $0x8] sm:$0xff]
    %v41 = vld [vmem:[%s5 + $0x10] sm:$0xff]
    %v42 = vld [vmem:[%s5 + $0x18] sm:$0xff]
    %v43 = vld [vmem:[%s6] sm:$0x1]
    %v44 = vld [vmem:[%s0] sm:$0xff]
    %v46 = vlaneseq
    %v47 = vshrl.u32 %v46, 7
    %v48 = vsub.s32 0, %v47
    %v49 = vrot.slane %v29, %v48
    %vm51 = vcmask 130048
    %v53 = vsel %vm51, %v44, 0
    %55 = vmatprep.subr.mxu0 0.0
    %56 = vmatpush1.msra.mxu0 0.0
    %57 = vmatprep.subr.mxu0 0.0
    %58 = vmatpush1.msra.mxu0 0.0
    %59 = vmatprep.subr.mxu0 0.0
    %60 = vmatpush1.msra.mxu0 0.0
    %61 = vmatprep.subr.mxu0 0.0
    %62 = vmatpush1.msra.mxu0 0.0
    %63 = vmatprep.subr.mxu0 0.0
    %64 = vmatpush1.msra.mxu0 0.0
    %65 = vmatprep.subr.mxu0 0.0
    %66 = vmatpush1.msra.mxu0 0.0
    %67 = vmatprep.subr.mxu0 0.0
    %68 = vmatpush1.msra.mxu0 0.0
    %69 = vmatprep.subr.mxu0 0.0
    %70 = vmatpush1.msra.mxu0 0.0
    %71 = vmatprep.subr.mxu0 0.0
    %72 = vmatpush1.msra.mxu0 0.0
    %73 = vmatprep.subr.mxu0 0.0
    %74 = vmatpush1.msra.mxu0 0.0
    %75 = vmatprep.subr.mxu0 0.0
    %76 = vmatpush1.msra.mxu0 0.0
    %77 = vmatprep.subr.mxu0 0.0
    %78 = vmatpush1.msra.mxu0 0.0
    %79 = vmatprep.subr.mxu0 0.0
    %80 = vmatpush1.msra.mxu0 0.0
    %81 = vmatprep.subr.mxu0 0.0
    %82 = vmatpush1.msra.mxu0 0.0
    %83 = vmatprep.subr.mxu0 0.0
    %84 = vmatpush1.msra.mxu0 %v28
    %85 = vmatprep.subr.mxu0 0.0
    %86 = vmatpush1.msra.mxu0 %v27
    %87 = vmatprep.subr.mxu0 0.0
    %88 = vmatpush2.msra.mxu0 0.0
    %89 = vmatprep.subr.mxu0 0.0
    %90 = vmatpush2.msra.mxu0 0.0
    %91 = vmatprep.subr.mxu0 0.0
    %92 = vmatpush2.msra.mxu0 0.0
    %93 = vmatprep.subr.mxu0 0.0
    %94 = vmatpush2.msra.mxu0 0.0
    %95 = vmatprep.subr.mxu0 0.0
    %96 = vmatpush2.msra.mxu0 0.0
    %97 = vmatprep.subr.mxu0 0.0
    %98 = vmatpush2.msra.mxu0 0.0
    %99 = vmatprep.subr.mxu0 0.0
    %100 = vmatpush2.msra.mxu0 0.0
    %101 = vmatprep.subr.mxu0 0.0
    %102 = vmatpush2.msra.mxu0 0.0
    %103 = vmatprep.subr.mxu0 0.0
    %104 = vmatpush2.msra.mxu0 0.0
    %105 = vmatprep.subr.mxu0 0.0
    %106 = vmatpush2.msra.mxu0 0.0
    %107 = vmatprep.subr.mxu0 0.0
    %108 = vmatpush2.msra.mxu0 0.0
    %109 = vmatprep.subr.mxu0 0.0
    %110 = vmatpush2.msra.mxu0 0.0
    %111 = vmatprep.subr.mxu0 0.0
    %112 = vmatpush2.msra.mxu0 0.0
    %113 = vmatprep.subr.mxu0 0.0
    %114 = vmatpush2.msra.mxu0 0.0
    %115 = vmatprep.subr.mxu0 0.0
    %116 = vmatpush2.msra.mxu0 0.0
    %117 = vmatprep.subr.mxu0 0.0
    %118 = vmatpush2.msra.mxu0 0.0
    %119 = vmatprep.mubr.f32.mxu0 0.0
    %120 = vmatmul.mubr.f32.gmra.mxu0 %v53
    %v121 = vpop.f32.mrf.mxu0
    %v122 = vadd.f32 %v49, %v121
    %v123 = vpop.f32.mrf.mxu0
    %124 = vdwg.mxu0
    %v125 = vtanh.pop %v122
    %v127 = vlaneseq
    %v128 = vshrl.u32 %v127, 7
    %v129 = vsub.s32 0, %v128
    %v130 = vrot.slane %v38, %v129
    %vm132 = vcmask 523264
    %v134 = vsel %vm132, %v125, 0
    %136 = vmatprep.subr.mxu0 0.0
    %137 = vmatpush1.msra.mxu0 0.0
    %138 = vmatprep.subr.mxu0 0.0
    %139 = vmatpush1.msra.mxu0 0.0
    %140 = vmatprep.subr.mxu0 0.0
    %141 = vmatpush1.msra.mxu0 0.0
    %142 = vmatprep.subr.mxu0 0.0
    %143 = vmatpush1.msra.mxu0 0.0
    %144 = vmatprep.subr.mxu0 0.0
    %145 = vmatpush1.msra.mxu0 0.0
    %146 = vmatprep.subr.mxu0 0.0
    %147 = vmatpush1.msra.mxu0 0.0
    %148 = vmatprep.subr.mxu0 0.0
    %149 = vmatpush1.msra.mxu0 0.0
    %150 = vmatprep.subr.mxu0 0.0
    %151 = vmatpush1.msra.mxu0 0.0
    %152 = vmatprep.subr.mxu0 0.0
    %153 = vmatpush1.msra.mxu0 %v37
    %154 = vmatprep.subr.mxu0 0.0
    %155 = vmatpush1.msra.mxu0 %v36
    %156 = vmatprep.subr.mxu0 0.0
    %157 = vmatpush1.msra.mxu0 %v35
    %158 = vmatprep.subr.mxu0 0.0
    %159 = vmatpush1.msra.mxu0 %v34
    %160 = vmatprep.subr.mxu0 0.0
    %161 = vmatpush1.msra.mxu0 %v33
    %162 = vmatprep.subr.mxu0 0.0
    %163 = vmatpush1.msra.mxu0 %v32
    %164 = vmatprep.subr.mxu0 0.0
    %165 = vmatpush1.msra.mxu0 %v31
    %166 = vmatprep.subr.mxu0 0.0
    %167 = vmatpush1.msra.mxu0 %v30
    %168 = vmatprep.subr.mxu0 0.0
    %169 = vmatpush2.msra.mxu0 0.0
    %170 = vmatprep.subr.mxu0 0.0
    %171 = vmatpush2.msra.mxu0 0.0
    %172 = vmatprep.subr.mxu0 0.0
    %173 = vmatpush2.msra.mxu0 0.0
    %174 = vmatprep.subr.mxu0 0.0
    %175 = vmatpush2.msra.mxu0 0.0
    %176 = vmatprep.subr.mxu0 0.0
    %177 = vmatpush2.msra.mxu0 0.0
    %178 = vmatprep.subr.mxu0 0.0
    %179 = vmatpush2.msra.mxu0 0.0
    %180 = vmatprep.subr.mxu0 0.0
    %181 = vmatpush2.msra.mxu0 0.0
    %182 = vmatprep.subr.mxu0 0.0
    %183 = vmatpush2.msra.mxu0 0.0
    %184 = vmatprep.subr.mxu0 0.0
    %185 = vmatpush2.msra.mxu0 0.0
    %186 = vmatprep.subr.mxu0 0.0
    %187 = vmatpush2.msra.mxu0 0.0
    %188 = vmatprep.subr.mxu0 0.0
    %189 = vmatpush2.msra.mxu0 0.0
    %190 = vmatprep.subr.mxu0 0.0
    %191 = vmatpush2.msra.mxu0 0.0
    %192 = vmatprep.subr.mxu0 0.0
    %193 = vmatpush2.msra.mxu0 0.0
    %194 = vmatprep.subr.mxu0 0.0
    %195 = vmatpush2.msra.mxu0 0.0
    %196 = vmatprep.subr.mxu0 0.0
    %197 = vmatpush2.msra.mxu0 0.0
    %198 = vmatprep.subr.mxu0 0.0
    %199 = vmatpush2.msra.mxu0 0.0
    %200 = vmatprep.mubr.f32.mxu0 0.0
    %201 = vmatmul.mubr.f32.gmra.mxu0 %v134
    %v202 = vpop.f32.mrf.mxu0
    %v203 = vadd.f32 %v130, %v202
    %v204 = vpop.f32.mrf.mxu0
    %205 = vdwg.mxu0
    %v206 = vtanh.pop %v203
    %v208 = vlaneseq
    %v209 = vshrl.u32 %v208, 7
    %v210 = vsub.s32 0, %v209
    %v211 = vrot.slane %v43, %v210
    %vm213 = vcmask 261120
    %v215 = vsel %vm213, %v206, 0
    %217 = vmatprep.subr.mxu0 0.0
    %218 = vmatpush1.msra.mxu0 0.0
    %219 = vmatprep.subr.mxu0 0.0
    %220 = vmatpush1.msra.mxu0 0.0
    %221 = vmatprep.subr.mxu0 0.0
    %222 = vmatpush1.msra.mxu0 0.0
    %223 = vmatprep.subr.mxu0 0.0
    %224 = vmatpush1.msra.mxu0 0.0
    %225 = vmatprep.subr.mxu0 0.0
    %226 = vmatpush1.msra.mxu0 0.0
    %227 = vmatprep.subr.mxu0 0.0
    %228 = vmatpush1.msra.mxu0 0.0
    %229 = vmatprep.subr.mxu0 0.0
    %230 = vmatpush1.msra.mxu0 0.0
    %231 = vmatprep.subr.mxu0 0.0
    %232 = vmatpush1.msra.mxu0 0.0
    %233 = vmatprep.subr.mxu0 0.0
    %234 = vmatpush1.msra.mxu0 0.0
    %235 = vmatprep.subr.mxu0 0.0
    %236 = vmatpush1.msra.mxu0 0.0
    %237 = vmatprep.subr.mxu0 0.0
    %238 = vmatpush1.msra.mxu0 0.0
    %239 = vmatprep.subr.mxu0 0.0
    %240 = vmatpush1.msra.mxu0 0.0
    %241 = vmatprep.subr.mxu0 0.0
    %242 = vmatpush1.msra.mxu0 %v42
    %243 = vmatprep.subr.mxu0 0.0
    %244 = vmatpush1.msra.mxu0 %v41
    %245 = vmatprep.subr.mxu0 0.0
    %246 = vmatpush1.msra.mxu0 %v40
    %247 = vmatprep.subr.mxu0 0.0
    %248 = vmatpush1.msra.mxu0 %v39
    %249 = vmatprep.subr.mxu0 0.0
    %250 = vmatpush2.msra.mxu0 0.0
    %251 = vmatprep.subr.mxu0 0.0
    %252 = vmatpush2.msra.mxu0 0.0
    %253 = vmatprep.subr.mxu0 0.0
    %254 = vmatpush2.msra.mxu0 0.0
    %255 = vmatprep.subr.mxu0 0.0
    %256 = vmatpush2.msra.mxu0 0.0
    %257 = vmatprep.subr.mxu0 0.0
    %258 = vmatpush2.msra.mxu0 0.0
    %259 = vmatprep.subr.mxu0 0.0
    %260 = vmatpush2.msra.mxu0 0.0
    %261 = vmatprep.subr.mxu0 0.0
    %262 = vmatpush2.msra.mxu0 0.0
    %263 = vmatprep.subr.mxu0 0.0
    %264 = vmatpush2.msra.mxu0 0.0
    %265 = vmatprep.subr.mxu0 0.0
    %266 = vmatpush2.msra.mxu0 0.0
    %267 = vmatprep.subr.mxu0 0.0
    %268 = vmatpush2.msra.mxu0 0.0
    %269 = vmatprep.subr.mxu0 0.0
    %270 = vmatpush2.msra.mxu0 0.0
    %271 = vmatprep.subr.mxu0 0.0
    %272 = vmatpush2.msra.mxu0 0.0
    %273 = vmatprep.subr.mxu0 0.0
    %274 = vmatpush2.msra.mxu0 0.0
    %275 = vmatprep.subr.mxu0 0.0
    %276 = vmatpush2.msra.mxu0 0.0
    %277 = vmatprep.subr.mxu0 0.0
    %278 = vmatpush2.msra.mxu0 0.0
    %279 = vmatprep.subr.mxu0 0.0
    %280 = vmatpush2.msra.mxu0 0.0
    %281 = vmatprep.mubr.f32.mxu0 0.0
    %282 = vmatmul.mubr.f32.gmra.mxu0 %v215
    %v283 = vpop.f32.mrf.mxu0
    %v284 = vadd.f32 %v211, %v283
    %v285 = vpop.f32.mrf.mxu0
    %286 = vdwg.mxu0
    %287 = vmax.xlane.f32.xlu0 %v284
    %v288 = vpop.xlane.xlu0 %287
    %v289 = vsub.f32 %v284, %v288
    %v290 = vmul.f32 %v289, 1.442695
    %v291 = vpow.pop %v290
    %292 = vadd.xlane.f32.xlu0 %v291
    %v293 = vpop.xlane.xlu0 %292
    %v294 = vrcp.pop %v293
    %v295 = vmul.f32 %v291, %v294
    %vm296 = vcmask 64512
    %297 = vst.msk [vmem:[#allocation2] sm:$0xff] %vm296, %v295
    // Predicated region
    $region30: #{tpu_custom_call.1} parent=1 // pred_check
      _
    $region31: #{tpu_custom_call.1} parent=1 // pred_check_branch
      %299 = sbr.rel (0) target = $region33
    $region32: #{tpu_custom_call.1} parent=1 // pred_region
      %s301 = ssub.s32 128, 128
      %302 = vsyncadd [#allocation3], %s301
      %s304 = sshll.u32 [#allocation2], 4
      %s305 = int_to_ptr.vmem [resolvable:$true] %s304
      %307 = dma.vmem_to_hbm [thread:$0]  %s305, 128, %s7, [#allocation3]
    $region33: #{tpu_custom_call.1} parent=1 // pred_fallthru
      _
    // Predicated region
    $region34: #{tpu_custom_call.1} parent=1 // pred_check
      _
    $region35: #{tpu_custom_call.1} parent=1 // pred_check_branch
      %309 = sbr.rel (0) target = $region37
    $region36: #{tpu_custom_call.1} parent=1 // pred_region
      %310 = dma.done [#allocation3], 128
    $region37: #{tpu_custom_call.1} parent=1 // pred_fallthru
      _
    %311 = vsyncpa [#allocation3], 1

</llo_original>
